<compile_context>
chip_gen: v7x
topology: tpu7x:2x2x1
jax: 0.10.0
libtpu: 0.0.40
codegen_flags: <defaults>
</compile_context>

<pallas_src>
import jax
import jax.numpy as jnp
from jax.experimental import pallas as pl
from jax.experimental.pallas import tpu as pltpu


def _round_up(x, m):
    return ((x + m - 1) // m) * m


def _linear_kernel(x_ref, w_ref, b_ref, o_ref):
    # Full-tile matmul on the MXU (f32 accumulate), bias add on the VPU.
    acc = jnp.dot(x_ref[...], w_ref[...], preferred_element_type=jnp.float32)
    o_ref[...] = (acc + b_ref[...]).astype(o_ref.dtype)


def fold_linear_params(w_t, b):
    """Build the lane-dense ("folded") weight/bias once, at init time.

    For N < 128 outputs, a (B, N) row-major result is bit-identical to a
    (B/P, P*N) result with P = 128/N, so P independent rows are folded into
    one 128-lane row.  The matching weight is block-diagonal (P*K, P*N) and
    the bias is tiled P times.  NOTE: if an input row contains inf/NaN, the
    zero off-diagonal blocks propagate NaN (inf*0) into the other P-1 rows of
    its folded group -- a semantic difference vs. unfolded nn.Linear for
    non-finite inputs only.
    """
    K, N = w_t.shape
    if N < 128 and 128 % N == 0 and K * (128 // N) <= 512:
        P = 128 // N
    else:
        P = 1
    if P > 1:
        w_big = jnp.zeros((P * K, P * N), w_t.dtype)
        for p in range(P):
            w_big = w_big.at[p * K:(p + 1) * K, p * N:(p + 1) * N].set(w_t)
        b_big = jnp.tile(b.reshape(1, N), (1, P))
    else:
        w_big = w_t
        b_big = b.reshape(1, N)
    return w_big, b_big, P


def _default_tile_rows():
    # 2048 folded rows = 1 MiB per input block: enough DMA per grid step to
    # amortize the ~0.35 us fixed per-step pipeline overhead on v5e/v6e while
    # fitting easily inside every generation's scoped-VMEM budget.  v7x's
    # ~3.2 TB/s HBM prefers a larger tile.  Defensive device-kind sniff.
    try:
        kind = jax.devices()[0].device_kind.lower()
    except Exception:
        return 2048
    return 4096 if "7" in kind else 2048


def _choose_tile(bf, tm_max):
    """Pick the folded-row tile size.

    - Tiny batches: one full-array block (grid=(1,)).
    - Otherwise: at least 2 grid steps so the "parallel" batch axis can be
      sharded across v7x's two TensorCores (on 1-TC chips the extra step only
      costs ~0.35 us); blocks kept a multiple of 8 sublanes; capped at tm_max.
    """
    if bf <= 8:
        return bf
    if bf <= tm_max:
        half = _round_up(pl.cdiv(bf, 2), 8)
        return half if half < bf else bf
    return tm_max


def pallas_linear_folded(x, w_big, b_big, P, N, *, tm_max=None):
    """y = x @ W^T + b, using the pre-folded block-diagonal weight/bias."""
    B, K = x.shape
    Kf, Nf = w_big.shape
    if tm_max is None:
        tm_max = _default_tile_rows()

    # Pad the batch only to a multiple of P (needed for the lane fold).  The
    # grid then uses cdiv with a partial last block instead of padding to a
    # tile multiple -- out-of-bounds output rows are never written back and
    # garbage padding rows stay within their own folded row.
    B_pad = _round_up(B, P)
    x_p = jnp.pad(x, ((0, B_pad - B), (0, 0))) if B_pad != B else x
    Bf = B_pad // P
    x_f = x_p.reshape(Bf, Kf)                # free row-major reinterpret

    tm = _choose_tile(Bf, tm_max)
    grid = (pl.cdiv(Bf, tm),)

    itemsize = jnp.dtype(x.dtype).itemsize
    cost = pl.CostEstimate(
        flops=2 * B * K * N,                 # useful flops only (no zero blocks)
        transcendentals=0,
        bytes_accessed=(Bf * Kf + Kf * Nf + Nf + Bf * Nf) * itemsize,
    )

    y_f = pl.pallas_call(
        _linear_kernel,
        out_shape=jax.ShapeDtypeStruct((Bf, Nf), x.dtype),
        grid=grid,
        in_specs=[
            # TODO(synk): on v7x, if a trace still shows exposed DMA gaps at
            # the 4096-row tile, add pipeline_mode=pl.Buffered(3) to this spec.
            pl.BlockSpec((tm, Kf), lambda i: (i, 0)),
            pl.BlockSpec((Kf, Nf), lambda i: (0, 0)),   # VMEM-resident weight
            pl.BlockSpec((1, Nf), lambda i: (0, 0)),    # VMEM-resident bias
        ],
        out_specs=pl.BlockSpec((tm, Nf), lambda i: (i, 0)),
        compiler_params=pltpu.CompilerParams(
            dimension_semantics=("parallel",),
            vmem_limit_bytes=32 * 1024 * 1024,   # raise v5e's 16 MiB default
        ),
        cost_estimate=cost,
    )(x_f, w_big, b_big)

    # Unfold + strip the (at most P-1 rows of) batch padding.
    return y_f.reshape(B_pad, N)[:B]


class MetalModuleWrapperJAX:
    """JAX/Pallas equivalent of MetalModuleWrapper wrapping an nn.Linear."""

    def __init__(self, in_features, out_features, key):
        k_w, k_b = jax.random.split(key)
        # Deterministic init mimicking nn.Linear's uniform(-1/sqrt(in), 1/sqrt(in)).
        bound = 1.0 / (in_features ** 0.5)
        w = jax.random.uniform(
            k_w, (out_features, in_features), jnp.float32, -bound, bound)
        b = jax.random.uniform(
            k_b, (out_features,), jnp.float32, -bound, bound)
        self.w_t = jnp.asarray(w.T)          # (in, out) so y = x @ W^T + b
        self.b = jnp.asarray(b)              # (out,)
        # Hoisted out of the per-call path: the folded weight/bias depend only
        # on the parameters, so build them exactly once here.
        self.w_big, self.b_big, self.P = fold_linear_params(self.w_t, self.b)
        self.out_features = out_features

    def module(self, data):
        # TODO(synk): at this tiny K=N=32 a fused XLA jnp.dot would also do;
        # the Pallas path pays off once the batch grid carries real work.
        return pallas_linear_folded(
            data, self.w_big, self.b_big, self.P, self.out_features)

    def forward(self, X):
        # Exact wrapper semantics: shallow-copy the dict, transform 'data'.
        X_out = {k: v for k, v in X.items()}
        X_out['data'] = self.module(X['data'])
        return X_out

    __call__ = forward


if __name__ == "__main__":
    key = jax.random.PRNGKey(0)
    k_param, k_data, k_label, k_big = jax.random.split(key, 4)

    batch, hidden = 8, 32
    wrapper = MetalModuleWrapperJAX(hidden, hidden, k_param)

    # Small, module-consistent shapes (single-block path, grid=(1,)).
    X = {
        "data": jax.random.normal(k_data, (batch, hidden), jnp.float32),
        "labels": jax.random.randint(k_label, (batch,), 0, 2),
    }
    X_out = wrapper(X)
    jax.block_until_ready(X_out["data"])

    assert X_out["labels"] is X["labels"]                 # pass-through intact
    ref = X["data"] @ wrapper.w_t + wrapper.b[None, :]
    assert jnp.allclose(X_out["data"], ref, atol=1e-5, rtol=1e-5)

    # Larger, non-multiple-of-4 batch: exercises pad-to-P + cdiv partial-block
    # grid (2 steps, no pad-to-tile-multiple, no extra copy-for-padding waste).
    big = jax.random.normal(k_big, (2050, hidden), jnp.float32)
    y_big = wrapper({"data": big})["data"]
    jax.block_until_ready(y_big)
    ref_big = big @ wrapper.w_t + wrapper.b[None, :]
    assert y_big.shape == ref_big.shape
    assert jnp.allclose(y_big, ref_big, atol=1e-4, rtol=1e-5)

    print("KERNEL_OK")
</pallas_src>

<mosaic_0001>
module attributes {stable_mosaic.version = 11 : i64} {
  func.func @_linear_kernel(%arg0: i32, %arg1: memref<2x128xf32, #tpu.memory_space<vmem>>, %arg2: memref<128x128xf32, #tpu.memory_space<vmem>>, %arg3: memref<1x128xf32, #tpu.memory_space<vmem>>, %arg4: memref<2x128xf32, #tpu.memory_space<vmem>>) attributes {dimension_semantics = [#tpu.dimension_semantics<parallel>], iteration_bounds = array<i64: 1>, scalar_prefetch = 0 : i64, scratch_operands = 0 : i64, tpu.core_type = #tpu.core_type<tc>, window_params = [{transform_indices = @transform_0, window_bounds = array<i64: 2, 128>}, {pipeline_mode = #tpu.pipeline_mode<synchronous>, transform_indices = @transform_1, window_bounds = array<i64: 128, 128>}, {pipeline_mode = #tpu.pipeline_mode<synchronous>, transform_indices = @transform_2, window_bounds = array<i64: 1, 128>}, {transform_indices = @transform_3, window_bounds = array<i64: 2, 128>}]} {
    %c0 = arith.constant 0 : index
    %c0_0 = arith.constant 0 : index
    %0 = vector.load %arg1[%c0, %c0_0] : memref<2x128xf32, #tpu.memory_space<vmem>>, vector<2x128xf32>
    %c0_1 = arith.constant 0 : index
    %c0_2 = arith.constant 0 : index
    %1 = vector.load %arg2[%c0_1, %c0_2] : memref<128x128xf32, #tpu.memory_space<vmem>>, vector<128x128xf32>
    %cst = arith.constant dense<0.000000e+00> : vector<2x128xf32>
    %2 = tpu.matmul %0, %1, %cst {dimension_numbers = #tpu.dot_dimension_numbers<[1], [0], [0], [1], [0, 0, 1, 1], [], []>} : vector<2x128xf32>, vector<128x128xf32>, vector<2x128xf32> -> vector<2x128xf32>
    %c0_3 = arith.constant 0 : index
    %c0_4 = arith.constant 0 : index
    %3 = vector.load %arg3[%c0_3, %c0_4] : memref<1x128xf32, #tpu.memory_space<vmem>>, vector<1x128xf32>
    %4 = vector.broadcast %3 : vector<1x128xf32> to vector<2x128xf32>
    %5 = arith.addf %2, %4 : vector<2x128xf32>
    %c0_5 = arith.constant 0 : index
    %c0_6 = arith.constant 0 : index
    %6 = vector.load %arg4[%c0_5, %c0_6] : memref<2x128xf32, #tpu.memory_space<vmem>>, vector<2x128xf32>
    tpu.vector_store %arg4[%c0_5, %c0_6], %5 {strides = array<i32>} : memref<2x128xf32, #tpu.memory_space<vmem>>, vector<2x128xf32>,
    return
  }
  func.func @transform_0(%arg0: i32) -> (i32, i32) {
    %c0_i32 = arith.constant 0 : i32
    %c0_i32_0 = arith.constant 0 : i32
    return %arg0, %c0_i32 : i32, i32
  }
  func.func @transform_1(%arg0: i32) -> (i32, i32) {
    %c0_i32 = arith.constant 0 : i32
    %c0_i32_0 = arith.constant 0 : i32
    %c0_i32_1 = arith.constant 0 : i32
    return %c0_i32, %c0_i32_0 : i32, i32
  }
  func.func @transform_2(%arg0: i32) -> (i32, i32) {
    %c0_i32 = arith.constant 0 : i32
    %c0_i32_0 = arith.constant 0 : i32
    %c0_i32_1 = arith.constant 0 : i32
    return %c0_i32, %c0_i32_0 : i32, i32
  }
  func.func @transform_3(%arg0: i32) -> (i32, i32) {
    %c0_i32 = arith.constant 0 : i32
    %c0_i32_0 = arith.constant 0 : i32
    return %arg0, %c0_i32 : i32, i32
  }
}

</mosaic_0001>

<llo_original>
// kernel: tpu_custom_call.1
$region0: #{tpu_custom_call.1}
  #allocation0 [shape = 'u32[]', space=smem, size = 0x4, offset = 0x4, fixed_abs, tag = 'smem constant byte address 0x4 - core index']
  #allocation1 [shape = 'u32[144,128]{1,0:T(1,128)}', space=vmem, size = 0x12000, scoped, tag = 'internal scratch']
  %s0 = inlined_call_operand.hbm [shape: f32[2,128], index: 0, kind: input, shape index: {}]
  %s1 = inlined_call_operand.hbm [shape: f32[128,128], index: 1, kind: input, shape index: {}]
  %s2 = inlined_call_operand.vmem [shape: f32[1,128], index: 2, kind: input, shape index: {}]
  %s3 = inlined_call_operand.hbm [shape: f32[2,128], index: 3, kind: output, shape index: {}]
  %s4 = sld [smem:[#allocation0]]
  $region30: #{tpu_custom_call.1} parent=0
    _
  %s6 = ssub.s32 1, %s4
  %s7 = scalar_select 0, %s6, %s4
  $region1: #{tpu_custom_call.1} parent=0
    #allocation2 [shape = 'u8[1024]{0}', space=vmem, size = 0x400, scoped, tag = 'input window, operand 0, single buffered']
    #allocation3 [shape = 's32[1]{0}', space=sflag, size = 0x4, scoped, tag = 'scoped memory for tpu_custom_call.1']
    #allocation4 [shape = 's32[1]{0}', space=sflag, size = 0x4, scoped, tag = 'scoped memory for tpu_custom_call.1']
    #allocation5 [shape = 'u8[65536]{0}', space=vmem, size = 0x10000, scoped, tag = 'input window, operand 1, single buffered']
    #allocation6 [shape = 's32[1]{0}', space=sflag, size = 0x4, scoped, tag = 'scoped memory for tpu_custom_call.1']
    #allocation7 [shape = 'u8[1024]{0}', space=vmem, size = 0x400, scoped, tag = 'output window, operand 0, single buffered']
    %8 = vsyncpa [#allocation3], 0
    %9 = vsyncpa [#allocation6], 0
    %10 = vsyncpa [#allocation4], 0
    // Predicated region
    $region2: #{tpu_custom_call.1} parent=1 // pred_check
      _
    $region3: #{tpu_custom_call.1} parent=1 // pred_check_branch
      %12 = sbr.rel (0) target = $region5
    $region4: #{tpu_custom_call.1} parent=1 // pred_region
      %s14 = ssub.s32 32, 32
      %15 = vsyncadd [#allocation3], %s14
      %s17 = sshll.u32 [#allocation2], 4
      %s18 = int_to_ptr.vmem [resolvable:$true] %s17
      %20 = dma.hbm_to_vmem [thread:$0]  %s0, 32, %s18, [#allocation3]
    $region5: #{tpu_custom_call.1} parent=1 // pred_fallthru
      _
    // Predicated region
    $region6: #{tpu_custom_call.1} parent=1 // pred_check
      _
    $region7: #{tpu_custom_call.1} parent=1 // pred_check_branch
      %22 = sbr.rel (0) target = $region9
    $region8: #{tpu_custom_call.1} parent=1 // pred_region
      %s24 = ssub.s32 2048, 2048
      %25 = vsyncadd [#allocation6], %s24
      %s26 = sshll.u32 [#allocation5], 4
      %s27 = int_to_ptr.vmem [resolvable:$true] %s26
      %32 = dma.hbm_to_vmem [thread:$0]  %s1, 2048, %s27, [#allocation6], 128, 128, 8
    $region9: #{tpu_custom_call.1} parent=1 // pred_fallthru
      _
    // Predicated region
    $region10: #{tpu_custom_call.1} parent=1 // pred_check
      _
    $region11: #{tpu_custom_call.1} parent=1 // pred_check_branch
      %34 = sbr.rel (0) target = $region13
    $region12: #{tpu_custom_call.1} parent=1 // pred_region
      _
    $region13: #{tpu_custom_call.1} parent=1 // pred_fallthru
      _
    // Predicated region
    $region14: #{tpu_custom_call.1} parent=1 // pred_check
      _
    $region15: #{tpu_custom_call.1} parent=1 // pred_check_branch
      %36 = sbr.rel (0) target = $region17
    $region16: #{tpu_custom_call.1} parent=1 // pred_region
      %37 = dma.done [#allocation3], 32
    $region17: #{tpu_custom_call.1} parent=1 // pred_fallthru
      _
    // Predicated region
    $region18: #{tpu_custom_call.1} parent=1 // pred_check
      _
    $region19: #{tpu_custom_call.1} parent=1 // pred_check_branch
      %39 = sbr.rel (0) target = $region21
    $region20: #{tpu_custom_call.1} parent=1 // pred_region
      %40 = dma.done [#allocation6], 2048
    $region21: #{tpu_custom_call.1} parent=1 // pred_fallthru
      _
    %v41 = vld [vmem:[#allocation2] sm:$0x3]
    %v42 = vld [vmem:[#allocation5] sm:$0xff]
    %v43 = vld [vmem:[#allocation5 + $0x8] sm:$0xff]
    %v44 = vld [vmem:[#allocation5 + $0x10] sm:$0xff]
    %v45 = vld [vmem:[#allocation5 + $0x18] sm:$0xff]
    %v46 = vld [vmem:[#allocation5 + $0x20] sm:$0xff]
    %v47 = vld [vmem:[#allocation5 + $0x28] sm:$0xff]
    %v48 = vld [vmem:[#allocation5 + $0x30] sm:$0xff]
    %v49 = vld [vmem:[#allocation5 + $0x38] sm:$0xff]
    %v50 = vld [vmem:[#allocation5 + $0x40] sm:$0xff]
    %v51 = vld [vmem:[#allocation5 + $0x48] sm:$0xff]
    %v52 = vld [vmem:[#allocation5 + $0x50] sm:$0xff]
    %v53 = vld [vmem:[#allocation5 + $0x58] sm:$0xff]
    %v54 = vld [vmem:[#allocation5 + $0x60] sm:$0xff]
    %v55 = vld [vmem:[#allocation5 + $0x68] sm:$0xff]
    %v56 = vld [vmem:[#allocation5 + $0x70] sm:$0xff]
    %v57 = vld [vmem:[#allocation5 + $0x78] sm:$0xff]
    %v58 = vld [vmem:[%s2] sm:$0x1]
    %v60 = vlaneseq
    %v61 = vshrl.u32 %v60, 7
    %v62 = vsub.s32 0, %v61
    %v63 = vrot.slane %v58, %v62
    %65 = vmatprep.subr.mxu0 0.0
    %66 = vmatpush1.msra.mxu0 %v42
    %67 = vmatprep.subr.mxu0 0.0
    %68 = vmatpush1.msra.mxu0 %v43
    %69 = vmatprep.subr.mxu0 0.0
    %70 = vmatpush1.msra.mxu0 %v44
    %71 = vmatprep.subr.mxu0 0.0
    %72 = vmatpush1.msra.mxu0 %v45
    %73 = vmatprep.subr.mxu0 0.0
    %74 = vmatpush1.msra.mxu0 %v46
    %75 = vmatprep.subr.mxu0 0.0
    %76 = vmatpush1.msra.mxu0 %v47
    %77 = vmatprep.subr.mxu0 0.0
    %78 = vmatpush1.msra.mxu0 %v48
    %79 = vmatprep.subr.mxu0 0.0
    %80 = vmatpush1.msra.mxu0 %v49
    %81 = vmatprep.subr.mxu0 0.0
    %82 = vmatpush1.msra.mxu0 %v50
    %83 = vmatprep.subr.mxu0 0.0
    %84 = vmatpush1.msra.mxu0 %v51
    %85 = vmatprep.subr.mxu0 0.0
    %86 = vmatpush1.msra.mxu0 %v52
    %87 = vmatprep.subr.mxu0 0.0
    %88 = vmatpush1.msra.mxu0 %v53
    %89 = vmatprep.subr.mxu0 0.0
    %90 = vmatpush1.msra.mxu0 %v54
    %91 = vmatprep.subr.mxu0 0.0
    %92 = vmatpush1.msra.mxu0 %v55
    %93 = vmatprep.subr.mxu0 0.0
    %94 = vmatpush1.msra.mxu0 %v56
    %95 = vmatprep.subr.mxu0 0.0
    %96 = vmatpush1.msra.mxu0 %v57
    %97 = vmatprep.subr.mxu0 0.0
    %98 = vmatpush1.msra.mxu0 0.0
    %99 = vmatprep.subr.mxu0 0.0
    %100 = vmatpush1.msra.mxu0 0.0
    %101 = vmatprep.subr.mxu0 0.0
    %102 = vmatpush1.msra.mxu0 0.0
    %103 = vmatprep.subr.mxu0 0.0
    %104 = vmatpush1.msra.mxu0 0.0
    %105 = vmatprep.subr.mxu0 0.0
    %106 = vmatpush1.msra.mxu0 0.0
    %107 = vmatprep.subr.mxu0 0.0
    %108 = vmatpush1.msra.mxu0 0.0
    %109 = vmatprep.subr.mxu0 0.0
    %110 = vmatpush1.msra.mxu0 0.0
    %111 = vmatprep.subr.mxu0 0.0
    %112 = vmatpush1.msra.mxu0 0.0
    %113 = vmatprep.subr.mxu0 0.0
    %114 = vmatpush1.msra.mxu0 0.0
    %115 = vmatprep.subr.mxu0 0.0
    %116 = vmatpush1.msra.mxu0 0.0
    %117 = vmatprep.subr.mxu0 0.0
    %118 = vmatpush1.msra.mxu0 0.0
    %119 = vmatprep.subr.mxu0 0.0
    %120 = vmatpush1.msra.mxu0 0.0
    %121 = vmatprep.subr.mxu0 0.0
    %122 = vmatpush1.msra.mxu0 0.0
    %123 = vmatprep.subr.mxu0 0.0
    %124 = vmatpush1.msra.mxu0 0.0
    %125 = vmatprep.subr.mxu0 0.0
    %126 = vmatpush1.msra.mxu0 0.0
    %127 = vmatprep.subr.mxu0 0.0
    %128 = vmatpush1.msra.mxu0 0.0
    %129 = vmatprep.mubr.f32.mxu0 0.0
    %130 = vmatmul.mubr.f32.gmra.mrb[0].mxu0 %v41
    %v131 = vpop.f32.mrb[0].mxu0
    %v132 = vadd.f32 %v63, %v131
    %v133 = vpop.f32.mrb[0].mxu0
    %134 = vdwg.mxu0
    %135 = vst [vmem:[#allocation7] sm:$0x3] %v132
    // Predicated region
    $region22: #{tpu_custom_call.1} parent=1 // pred_check
      _
    $region23: #{tpu_custom_call.1} parent=1 // pred_check_branch
      %137 = sbr.rel (0) target = $region25
    $region24: #{tpu_custom_call.1} parent=1 // pred_region
      %s139 = ssub.s32 32, 32
      %140 = vsyncadd [#allocation4], %s139
      %s142 = sshll.u32 [#allocation7], 4
      %s143 = int_to_ptr.vmem [resolvable:$true] %s142
      %145 = dma.vmem_to_hbm [thread:$0]  %s143, 32, %s3, [#allocation4]
    $region25: #{tpu_custom_call.1} parent=1 // pred_fallthru
      _
    // Predicated region
    $region26: #{tpu_custom_call.1} parent=1 // pred_check
      _
    $region27: #{tpu_custom_call.1} parent=1 // pred_check_branch
      %147 = sbr.rel (0) target = $region29
    $region28: #{tpu_custom_call.1} parent=1 // pred_region
      %148 = dma.done [#allocation4], 32
    $region29: #{tpu_custom_call.1} parent=1 // pred_fallthru
      _
    %149 = vsyncpa [#allocation3], 1
    %150 = vsyncpa [#allocation6], 1
    %151 = vsyncpa [#allocation4], 1

</llo_original>
